<compile_context>
chip_gen: v6e
topology: v6e:2x2x1
jax: 0.10.0
libtpu: 0.0.40
codegen_flags: <defaults>
</compile_context>

<pallas_src>
import functools
import math

import jax
import jax.numpy as jnp
from jax.experimental import pallas as pl
from jax.experimental.pallas import tpu as pltpu


_SUBLANE = {4: 8, 2: 16, 1: 32}      # sublane multiple per itemsize


def _round_up(x, m):
    return ((x + m - 1) // m) * m


def _cdiv(a, b):
    return -(-a // b)


def _hw_config():
    """Generation-aware tile / VMEM-limit selection."""
    vmem_cap = 64 * 1024 * 1024
    try:
        info = pltpu.get_tpu_info()
        vmem_cap = int(getattr(info, "vmem_capacity_bytes", vmem_cap))
    except Exception:
        pass
    if vmem_cap >= 100 * 1024 * 1024:       # v5e / v6e class (128 MiB VMEM)
        return {"tile_bytes": 16 * 1024 * 1024,
                "tile_bytes_mid": 6 * 1024 * 1024,
                "vmem_limit": 80 * 1024 * 1024}
    else:                                   # v7x class (64 MiB VMEM)
        return {"tile_bytes": 8 * 1024 * 1024,
                "tile_bytes_mid": 4 * 1024 * 1024,
                "vmem_limit": 40 * 1024 * 1024}


# ---------------------------------------------------------------------------
# Kernel A: trailing reduction.  View (B, S), per-row sum(yt*yp), sum(yt+yp).
# ---------------------------------------------------------------------------
def _dice_rows_kernel(yp_ref, yt_ref, prod_ref, sum_ref, acc_p_ref, acc_s_ref,
                      *, n_chunks, block_s, stripe, valid_last, ragged,
                      has_dup, unroll):
    # grid = (s_splits, row_blocks, chunks_per_split); chunk axis innermost.
    p = pl.program_id(0)
    s = pl.program_id(2)
    n_sps = pl.num_programs(2)
    g = p * n_sps + s                       # global S-chunk index

    @pl.when(s == 0)
    def _init():
        acc_p_ref[...] = jnp.zeros_like(acc_p_ref)
        acc_s_ref[...] = jnp.zeros_like(acc_s_ref)

    n_stripes = block_s // stripe

    def accumulate(masked):
        # Stripe loop bounds temporaries / live vregs; carries stay in-register
        # and the VMEM accumulators are touched once per grid step.
        def body(i, carry):
            cp, cs = carry
            off = i * stripe
            if n_stripes > 1:
                off = pl.multiple_of(off, stripe)
            yp = yp_ref[:, pl.ds(off, stripe)].astype(jnp.float32)
            yt = yt_ref[:, pl.ds(off, stripe)].astype(jnp.float32)
            if masked:
                col = jax.lax.broadcasted_iota(jnp.int32, yp.shape, 1) + off
                ok = col < valid_last
                yp = jnp.where(ok, yp, 0.0)
                yt = jnp.where(ok, yt, 0.0)
            return cp + yt * yp, cs + yt + yp

        init = (jnp.zeros(acc_p_ref.shape, jnp.float32),
                jnp.zeros(acc_s_ref.shape, jnp.float32))
        if n_stripes == 1:
            cp, cs = body(0, init)
        else:
            cp, cs = jax.lax.fori_loop(0, n_stripes, body, init, unroll=unroll)
        acc_p_ref[...] += cp
        acc_s_ref[...] += cs

    # Masking only on the last *real* chunk; duplicate chunks (from the 2-way
    # S split when the chunk count is odd) are skipped entirely.
    if ragged:
        @pl.when(g < n_chunks - 1)
        def _main():
            accumulate(False)

        @pl.when(g == n_chunks - 1)
        def _last():
            accumulate(True)
    elif has_dup:
        @pl.when(g < n_chunks)
        def _main():
            accumulate(False)
    else:
        accumulate(False)

    @pl.when(s == n_sps - 1)
    def _finalize():
        prod_ref[0] = jnp.sum(acc_p_ref[...], axis=-1, keepdims=True)
        sum_ref[0] = jnp.sum(acc_s_ref[...], axis=-1, keepdims=True)


def _dice_rows(yp2d, yt2d, *, tile_bytes, vmem_limit):
    """yp2d, yt2d: (B, S).  Returns f32 (sum(yt*yp), sum(yt+yp)), each (B,)."""
    B, S = yp2d.shape
    itemsize = max(yp2d.dtype.itemsize, yt2d.dtype.itemsize)
    sub = max(_SUBLANE.get(yp2d.dtype.itemsize, 8),
              _SUBLANE.get(yt2d.dtype.itemsize, 8))
    elems = max(tile_bytes // itemsize, sub * 512)    # per-input block budget

    # ---- S (lane) blocking + in-kernel stripe width. ----
    if S <= 512:
        block_s, stripe = S, S
    else:
        cap = max(512, (elems // sub) // 512 * 512)
        block_s = max(512, min((S // 512) * 512, cap))
        if block_s >= 2048:
            block_s = (block_s // 2048) * 2048        # stripes divisible by 4
        stripe = 512
    n_stripes = block_s // stripe
    unroll = n_stripes if n_stripes <= 4 else (4 if n_stripes % 4 == 0 else 1)

    # ---- B (row) blocking.  Cap so per-stripe temporaries stay small. ----
    # TODO(synk): the huge-B / tiny-S corner trades tile size for bounded
    # temporaries; a row-panel inner loop would recover full-size tiles there.
    if B <= sub:
        b_blk = B
    else:
        rows_budget = max(sub, (elems // block_s) // sub * sub)
        rows_temp_cap = max(sub, (32768 // stripe) // sub * sub)
        b_blk = min((B // sub) * sub, rows_budget, rows_temp_cap)
    n_b = _cdiv(B, b_blk)
    b_pad = n_b * b_blk

    n_s = _cdiv(S, block_s)
    ragged = (S % block_s) != 0
    valid_last = S - (n_s - 1) * block_s

    # ---- 2-way S split so both v7x TensorCores stream HBM when B is small. ----
    s_splits = 2 if (n_b == 1 and n_s >= 2) else 1
    n_sps = _cdiv(n_s, s_splits)
    has_dup = (s_splits * n_sps) != n_s

    def in_map(p, b, s):
        g = p * n_sps + s
        if has_dup:
            g = jnp.minimum(g, n_s - 1)    # duplicate chunk is skipped in-kernel
        return (b, g)

    kernel = functools.partial(
        _dice_rows_kernel, n_chunks=n_s, block_s=block_s, stripe=stripe,
        valid_last=valid_last, ragged=ragged, has_dup=has_dup, unroll=unroll)

    out_sds = jax.ShapeDtypeStruct((s_splits, b_pad, 1), jnp.float32)
    bytes_accessed = int(B * S * (yp2d.dtype.itemsize + yt2d.dtype.itemsize)
                         + 2 * s_splits * b_pad * 4)
    cost = pl.CostEstimate(flops=int(4 * B * S), transcendentals=0,
                           bytes_accessed=bytes_accessed)

    prod_sum, sum_sum = pl.pallas_call(
        kernel,
        out_shape=(out_sds, out_sds),
        grid_spec=pltpu.PrefetchScalarGridSpec(
            num_scalar_prefetch=0,
            grid=(s_splits, n_b, n_sps),
            in_specs=[pl.BlockSpec((b_blk, block_s), in_map),
                      pl.BlockSpec((b_blk, block_s), in_map)],
            out_specs=[pl.BlockSpec((1, b_blk, 1), lambda p, b, s: (p, b, 0)),
                       pl.BlockSpec((1, b_blk, 1), lambda p, b, s: (p, b, 0))],
            scratch_shapes=[pltpu.VMEM((b_blk, stripe), jnp.float32),
                            pltpu.VMEM((b_blk, stripe), jnp.float32)],
        ),
        compiler_params=pltpu.CompilerParams(
            dimension_semantics=("parallel", "parallel", "arbitrary"),
            vmem_limit_bytes=vmem_limit),
        cost_estimate=cost,
    )(yp2d, yt2d)

    prod_sum = jnp.sum(prod_sum[:, :B, 0], axis=0)
    sum_sum = jnp.sum(sum_sum[:, :B, 0], axis=0)
    return prod_sum, sum_sum


# ---------------------------------------------------------------------------
# Kernel B: interior reduction.  View (P, S, Q), reduce the middle axis.
# No transposed HBM copy is ever made for non-trailing dims_sum.
# ---------------------------------------------------------------------------
def _dice_mid_kernel(yp_ref, yt_ref, prod_ref, sum_ref, *, valid_last, ragged):
    s = pl.program_id(2)
    n_s = pl.num_programs(2)

    @pl.when(s == 0)
    def _init():
        prod_ref[...] = jnp.zeros_like(prod_ref)
        sum_ref[...] = jnp.zeros_like(sum_ref)

    def accumulate(masked):
        yp = yp_ref[...].astype(jnp.float32)
        yt = yt_ref[...].astype(jnp.float32)
        if masked:
            row = jax.lax.broadcasted_iota(jnp.int32, yp.shape, 1)
            ok = row < valid_last
            yp = jnp.where(ok, yp, 0.0)
            yt = jnp.where(ok, yt, 0.0)
        prod_ref[...] += jnp.sum(yt * yp, axis=1)
        sum_ref[...] += jnp.sum(yt + yp, axis=1)

    if ragged:
        @pl.when(s < n_s - 1)
        def _main():
            accumulate(False)

        @pl.when(s == n_s - 1)
        def _last():
            accumulate(True)
    else:
        accumulate(False)


def _dice_mid(yp3d, yt3d, *, tile_bytes, vmem_limit):
    """yp3d, yt3d: (P, S, Q); returns f32 (sum(yt*yp), sum(yt+yp)) of shape (P, Q)."""
    P, S, Q = yp3d.shape
    itemsize = max(yp3d.dtype.itemsize, yt3d.dtype.itemsize)
    elems = max(tile_bytes // itemsize, 1024)

    q_blk = Q if Q <= 2048 else 2048
    n_q = _cdiv(Q, q_blk)
    q_pad = n_q * q_blk

    p0 = P if P <= 8 else 8
    s_blk = min(S, max(8, (elems // (p0 * q_blk)) // 8 * 8))
    if s_blk >= S:
        s_blk = S
    n_s = _cdiv(S, s_blk)
    ragged = (S % s_blk) != 0
    valid_last = S - (n_s - 1) * s_blk

    if s_blk == S and P > 8:
        p_blk = min((P // 8) * 8, max(8, (elems // (S * q_blk)) // 8 * 8))
    else:
        p_blk = p0
    n_p = _cdiv(P, p_blk)
    p_pad = n_p * p_blk

    kernel = functools.partial(_dice_mid_kernel, valid_last=valid_last,
                               ragged=ragged)
    out_sds = jax.ShapeDtypeStruct((p_pad, q_pad), jnp.float32)
    bytes_accessed = int(P * S * Q * (yp3d.dtype.itemsize + yt3d.dtype.itemsize)
                         + 2 * p_pad * q_pad * 4)
    cost = pl.CostEstimate(flops=int(4 * P * S * Q), transcendentals=0,
                           bytes_accessed=bytes_accessed)

    prod_sum, sum_sum = pl.pallas_call(
        kernel,
        out_shape=(out_sds, out_sds),
        grid_spec=pltpu.PrefetchScalarGridSpec(
            num_scalar_prefetch=0,
            grid=(n_p, n_q, n_s),
            in_specs=[pl.BlockSpec((p_blk, s_blk, q_blk), lambda i, j, k: (i, k, j)),
                      pl.BlockSpec((p_blk, s_blk, q_blk), lambda i, j, k: (i, k, j))],
            out_specs=[pl.BlockSpec((p_blk, q_blk), lambda i, j, k: (i, j)),
                       pl.BlockSpec((p_blk, q_blk), lambda i, j, k: (i, j))],
        ),
        compiler_params=pltpu.CompilerParams(
            dimension_semantics=("parallel", "parallel", "arbitrary"),
            vmem_limit_bytes=vmem_limit),
        cost_estimate=cost,
    )(yp3d, yt3d)

    return prod_sum[:P, :Q], sum_sum[:P, :Q]


# ---------------------------------------------------------------------------
# Module wrapper (forward-pass semantics of the PyTorch Dice module).
# ---------------------------------------------------------------------------
class Dice:
    """JAX/Pallas port of the PyTorch Dice module (forward pass)."""

    def __init__(self, eps=1e-08):
        self.eps = eps

    def __call__(self, y_pred, y_true, dims_sum, return_before_divide=False):
        assert y_pred.shape == y_true.shape, \
            'The prediction and ground truth must be of the same size!'
        ndim = y_pred.ndim
        if isinstance(dims_sum, int):
            dims_sum = (dims_sum,)
        dims = tuple(sorted({d % ndim for d in dims_sum}))

        out_dtype = jnp.result_type(y_pred.dtype, y_true.dtype)
        if not jnp.issubdtype(out_dtype, jnp.inexact):
            out_dtype = jnp.float32

        if not dims:  # degenerate: no reduction requested
            num = (2.0 * y_true * y_pred)
            den = (y_true + y_pred)
            if return_before_divide:
                return num.astype(out_dtype), den.astype(out_dtype)
            return ((num + self.eps) / (den + self.eps)).astype(out_dtype)

        shape = y_pred.shape
        dset = set(dims)

        # Maximal contiguous runs of reduced dims; reduce the largest one
        # in-kernel (no transpose), sum any leftover runs with tiny jnp ops.
        runs = []
        d = 0
        while d < ndim:
            if d in dset:
                e = d
                while e < ndim and e in dset:
                    e += 1
                runs.append((d, e))
                d = e
            else:
                d += 1
        a, b = max(runs, key=lambda r: math.prod(shape[r[0]:r[1]]))

        S = math.prod(shape[a:b])
        P = math.prod(shape[:a])
        Q = math.prod(shape[b:])
        cfg = _hw_config()

        if b == ndim:                     # trailing run: free reshape to (P, S)
            ps, ss = _dice_rows(y_pred.reshape(P, S), y_true.reshape(P, S),
                                tile_bytes=cfg["tile_bytes"],
                                vmem_limit=cfg["vmem_limit"])
            part_shape = shape[:a]
        else:                             # interior run: free reshape to (P, S, Q)
            ps, ss = _dice_mid(y_pred.reshape(P, S, Q), y_true.reshape(P, S, Q),
                               tile_bytes=cfg["tile_bytes_mid"],
                               vmem_limit=cfg["vmem_limit"])
            part_shape = shape[:a] + shape[b:]

        ps = ps.reshape(part_shape)
        ss = ss.reshape(part_shape)

        remaining = [d for d in dims if not (a <= d < b)]
        if remaining:
            rem_axes = tuple(d if d < a else d - (b - a) for d in remaining)
            ps = jnp.sum(ps, axis=rem_axes)
            ss = jnp.sum(ss, axis=rem_axes)

        numerator = 2.0 * ps
        denominator = ss
        if return_before_divide:
            return numerator.astype(out_dtype), denominator.astype(out_dtype)
        dice = (numerator + self.eps) / (denominator + self.eps)
        return dice.astype(out_dtype)


# ---------------------------------------------------------------------------
# Self-test
# ---------------------------------------------------------------------------
if __name__ == "__main__":
    key = jax.random.PRNGKey(0)
    keys = jax.random.split(key, 8)

    dice_mod = Dice(eps=1e-08)
    tol = dict(rtol=1e-5, atol=1e-5)

    def ref_sums(yp, yt, dims):
        f = jnp.float32
        return (jnp.sum(yt.astype(f) * yp.astype(f), axis=dims),
                jnp.sum(yt.astype(f) + yp.astype(f), axis=dims))

    # --- Module-level checks on an NCHW tensor, several dims_sum patterns. ---
    N, C, H, W = 2, 4, 16, 16
    y_pred = jax.nn.sigmoid(jax.random.normal(keys[0], (N, C, H, W), jnp.float32))
    y_true = (jax.random.uniform(keys[1], (N, C, H, W)) > 0.5).astype(jnp.float32)

    for dims in [(2, 3), (0, 1), (1, 2), (0, 2, 3), (0, 1, 2, 3)]:
        dice = dice_mod(y_pred, y_true, dims)
        num, den = dice_mod(y_pred, y_true, dims, return_before_divide=True)
        jax.block_until_ready((dice, num, den))
        rp, rs = ref_sums(y_pred, y_true, dims)
        rnum, rden = 2.0 * rp, rs
        rdice = (rnum + dice_mod.eps) / (rden + dice_mod.eps)
        assert dice.shape == rdice.shape, dims
        assert jnp.allclose(num, rnum, **tol), dims
        assert jnp.allclose(den, rden, **tol), dims
        assert jnp.allclose(dice, rdice, **tol), dims

    # --- Row kernel: multi-chunk + ragged S + 2-way S split (megacore path). ---
    yp = jax.nn.sigmoid(jax.random.normal(keys[2], (5, 1200), jnp.float32))
    yt = (jax.random.uniform(keys[3], (5, 1200)) > 0.5).astype(jnp.float32)
    ps, ss = _dice_rows(yp, yt, tile_bytes=8192, vmem_limit=32 * 1024 * 1024)
    jax.block_until_ready((ps, ss))
    rp, rs = ref_sums(yp, yt, (1,))
    assert jnp.allclose(ps, rp, **tol) and jnp.allclose(ss, rs, **tol)

    # --- Row kernel: several row blocks + several lane stripes + ragged S. ---
    yp = jax.nn.sigmoid(jax.random.normal(keys[4], (20, 2000), jnp.float32))
    yt = (jax.random.uniform(keys[5], (20, 2000)) > 0.5).astype(jnp.float32)
    ps, ss = _dice_rows(yp, yt, tile_bytes=65536, vmem_limit=32 * 1024 * 1024)
    jax.block_until_ready((ps, ss))
    rp, rs = ref_sums(yp, yt, (1,))
    assert jnp.allclose(ps, rp, **tol) and jnp.allclose(ss, rs, **tol)

    # --- Row kernel: bf16 inputs (in-register f32 upcast path). ---
    yp = jax.nn.sigmoid(jax.random.normal(keys[6], (4, 1000), jnp.float32)).astype(jnp.bfloat16)
    yt = (jax.random.uniform(keys[7], (4, 1000)) > 0.5).astype(jnp.bfloat16)
    ps, ss = _dice_rows(yp, yt, tile_bytes=1 << 20, vmem_limit=32 * 1024 * 1024)
    jax.block_until_ready((ps, ss))
    rp, rs = ref_sums(yp, yt, (1,))
    assert jnp.allclose(ps, rp, **tol) and jnp.allclose(ss, rs, **tol)

    # --- Interior-axis kernel: ragged S chunks. ---
    yp = jax.nn.sigmoid(jax.random.normal(keys[2], (5, 100, 136), jnp.float32))
    yt = (jax.random.uniform(keys[3], (5, 100, 136)) > 0.5).astype(jnp.float32)
    ps, ss = _dice_mid(yp, yt, tile_bytes=16384, vmem_limit=32 * 1024 * 1024)
    jax.block_until_ready((ps, ss))
    rp, rs = ref_sums(yp, yt, (1,))
    assert jnp.allclose(ps, rp, **tol) and jnp.allclose(ss, rs, **tol)

    # --- Interior-axis kernel: Q tiled over multiple lane blocks. ---
    yp = jax.nn.sigmoid(jax.random.normal(keys[4], (3, 20, 2300), jnp.float32))
    yt = (jax.random.uniform(keys[5], (3, 20, 2300)) > 0.5).astype(jnp.float32)
    ps, ss = _dice_mid(yp, yt, tile_bytes=16384, vmem_limit=32 * 1024 * 1024)
    jax.block_until_ready((ps, ss))
    rp, rs = ref_sums(yp, yt, (1,))
    assert jnp.allclose(ps, rp, **tol) and jnp.allclose(ss, rs, **tol)

    print("KERNEL_OK")
</pallas_src>

<mosaic_0001>
module attributes {stable_mosaic.version = 11 : i64} {
  func.func @_dice_rows_kernel(%arg0: i32, %arg1: i32, %arg2: i32, %arg3: memref<8x256xf32, #tpu.memory_space<vmem>>, %arg4: memref<8x256xf32, #tpu.memory_space<vmem>>, %arg5: memref<1x8x1xf32, #tpu.memory_space<vmem>>, %arg6: memref<1x8x1xf32, #tpu.memory_space<vmem>>, %arg7: memref<8x256xf32, #tpu.memory_space<vmem>>, %arg8: memref<8x256xf32, #tpu.memory_space<vmem>>) attributes {dimension_semantics = [#tpu.dimension_semantics<parallel>, #tpu.dimension_semantics<parallel>, #tpu.dimension_semantics<arbitrary>], iteration_bounds = array<i64: 1, 1, 1>, scalar_prefetch = 0 : i64, scratch_operands = 2 : i64, tpu.core_type = #tpu.core_type<tc>, window_params = [{transform_indices = @transform_0, window_bounds = array<i64: 8, 256>}, {transform_indices = @transform_1, window_bounds = array<i64: 8, 256>}, {transform_indices = @transform_2, window_bounds = array<i64: 1, 8, 1>}, {transform_indices = @transform_3, window_bounds = array<i64: 1, 8, 1>}]} {
    %c0_i32 = arith.constant 0 : i32
    %0 = arith.cmpi eq, %arg2, %c0_i32 : i32
    %1 = arith.extui %0 : i1 to i32
    %c0_i32_0 = arith.constant 0 : i32
    %2 = arith.cmpi ne, %1, %c0_i32_0 : i32
    scf.if %2 {
      %cst_15 = arith.constant 0.000000e+00 : f32
      %20 = vector.broadcast %cst_15 : f32 to vector<8x256xf32>
      %c0_16 = arith.constant 0 : index
      %c0_17 = arith.constant 0 : index
      %21 = vector.load %arg7[%c0_16, %c0_17] : memref<8x256xf32, #tpu.memory_space<vmem>>, vector<8x256xf32>
      tpu.vector_store %arg7[%c0_16, %c0_17], %20 {strides = array<i32>} : memref<8x256xf32, #tpu.memory_space<vmem>>, vector<8x256xf32>,
      %cst_18 = arith.constant 0.000000e+00 : f32
      %22 = vector.broadcast %cst_18 : f32 to vector<8x256xf32>
      %c0_19 = arith.constant 0 : index
      %c0_20 = arith.constant 0 : index
      %23 = vector.load %arg8[%c0_19, %c0_20] : memref<8x256xf32, #tpu.memory_space<vmem>>, vector<8x256xf32>
      tpu.vector_store %arg8[%c0_19, %c0_20], %22 {strides = array<i32>} : memref<8x256xf32, #tpu.memory_space<vmem>>, vector<8x256xf32>,
    } else {
    }
    %cst = arith.constant 0.000000e+00 : f32
    %3 = vector.broadcast %cst : f32 to vector<8x256xf32>
    %cst_1 = arith.constant 0.000000e+00 : f32
    %4 = vector.broadcast %cst_1 : f32 to vector<8x256xf32>
    %c0 = arith.constant 0 : index
    %c0_2 = arith.constant 0 : index
    %5 = vector.load %arg3[%c0, %c0_2] : memref<8x256xf32, #tpu.memory_space<vmem>>, vector<8x256xf32>
    %c0_3 = arith.constant 0 : index
    %c0_4 = arith.constant 0 : index
    %6 = vector.load %arg4[%c0_3, %c0_4] : memref<8x256xf32, #tpu.memory_space<vmem>>, vector<8x256xf32>
    %7 = arith.mulf %6, %5 : vector<8x256xf32>
    %8 = arith.addf %3, %7 : vector<8x256xf32>
    %9 = arith.addf %4, %6 : vector<8x256xf32>
    %10 = arith.addf %9, %5 : vector<8x256xf32>
    %c0_5 = arith.constant 0 : index
    %c0_6 = arith.constant 0 : index
    %11 = vector.load %arg7[%c0_5, %c0_6] : memref<8x256xf32, #tpu.memory_space<vmem>>, vector<8x256xf32>
    %12 = arith.addf %11, %8 : vector<8x256xf32>
    %c0_7 = arith.constant 0 : index
    %c0_8 = arith.constant 0 : index
    %13 = vector.load %arg7[%c0_7, %c0_8] : memref<8x256xf32, #tpu.memory_space<vmem>>, vector<8x256xf32>
    tpu.vector_store %arg7[%c0_7, %c0_8], %12 {strides = array<i32>} : memref<8x256xf32, #tpu.memory_space<vmem>>, vector<8x256xf32>,
    %c0_9 = arith.constant 0 : index
    %c0_10 = arith.constant 0 : index
    %14 = vector.load %arg8[%c0_9, %c0_10] : memref<8x256xf32, #tpu.memory_space<vmem>>, vector<8x256xf32>
    %15 = arith.addf %14, %10 : vector<8x256xf32>
    %c0_11 = arith.constant 0 : index
    %c0_12 = arith.constant 0 : index
    %16 = vector.load %arg8[%c0_11, %c0_12] : memref<8x256xf32, #tpu.memory_space<vmem>>, vector<8x256xf32>
    tpu.vector_store %arg8[%c0_11, %c0_12], %15 {strides = array<i32>} : memref<8x256xf32, #tpu.memory_space<vmem>>, vector<8x256xf32>,
    %c0_i32_13 = arith.constant 0 : i32
    %17 = arith.cmpi eq, %arg2, %c0_i32_13 : i32
    %18 = arith.extui %17 : i1 to i32
    %c0_i32_14 = arith.constant 0 : i32
    %19 = arith.cmpi ne, %18, %c0_i32_14 : i32
    scf.if %19 {
      %c0_15 = arith.constant 0 : index
      %c0_16 = arith.constant 0 : index
      %20 = vector.load %arg7[%c0_15, %c0_16] : memref<8x256xf32, #tpu.memory_space<vmem>>, vector<8x256xf32>
      %cst_17 = arith.constant dense<0.000000e+00> : vector<8xf32>
      %21 = vector.multi_reduction <add>, %20, %cst_17 [1] : vector<8x256xf32> to vector<8xf32>
      %22 = vector.shape_cast %21 : vector<8xf32> to vector<8x1xf32>
      %c0_18 = arith.constant 0 : index
      %c0_19 = arith.constant 0 : index
      %c0_20 = arith.constant 0 : index
      %23 = vector.load %arg5[%c0_18, %c0_19, %c0_20] : memref<1x8x1xf32, #tpu.memory_space<vmem>>, vector<1x8x1xf32>
      %24 = vector.shape_cast %23 : vector<1x8x1xf32> to vector<8x1xf32>
      %25 = vector.shape_cast %22 : vector<8x1xf32> to vector<1x8x1xf32>
      tpu.vector_store %arg5[%c0_18, %c0_19, %c0_20], %25 {strides = array<i32>} : memref<1x8x1xf32, #tpu.memory_space<vmem>>, vector<1x8x1xf32>,
      %c0_21 = arith.constant 0 : index
      %c0_22 = arith.constant 0 : index
      %26 = vector.load %arg8[%c0_21, %c0_22] : memref<8x256xf32, #tpu.memory_space<vmem>>, vector<8x256xf32>
      %cst_23 = arith.constant dense<0.000000e+00> : vector<8xf32>
      %27 = vector.multi_reduction <add>, %26, %cst_23 [1] : vector<8x256xf32> to vector<8xf32>
      %28 = vector.shape_cast %27 : vector<8xf32> to vector<8x1xf32>
      %c0_24 = arith.constant 0 : index
      %c0_25 = arith.constant 0 : index
      %c0_26 = arith.constant 0 : index
      %29 = vector.load %arg6[%c0_24, %c0_25, %c0_26] : memref<1x8x1xf32, #tpu.memory_space<vmem>>, vector<1x8x1xf32>
      %30 = vector.shape_cast %29 : vector<1x8x1xf32> to vector<8x1xf32>
      %31 = vector.shape_cast %28 : vector<8x1xf32> to vector<1x8x1xf32>
      tpu.vector_store %arg6[%c0_24, %c0_25, %c0_26], %31 {strides = array<i32>} : memref<1x8x1xf32, #tpu.memory_space<vmem>>, vector<1x8x1xf32>,
    } else {
    }
    return
  }
  func.func @transform_0(%arg0: i32, %arg1: i32, %arg2: i32) -> (i32, i32) {
    %c1_i32 = arith.constant 1 : i32
    %0 = arith.muli %arg0, %c1_i32 : i32
    %1 = arith.addi %0, %arg2 : i32
    %c0_i32 = arith.constant 0 : i32
    return %arg1, %1 : i32, i32
  }
  func.func @transform_1(%arg0: i32, %arg1: i32, %arg2: i32) -> (i32, i32) {
    %c1_i32 = arith.constant 1 : i32
    %0 = arith.muli %arg0, %c1_i32 : i32
    %1 = arith.addi %0, %arg2 : i32
    %c0_i32 = arith.constant 0 : i32
    return %arg1, %1 : i32, i32
  }
  func.func @transform_2(%arg0: i32, %arg1: i32, %arg2: i32) -> (i32, i32, i32) {
    %c0_i32 = arith.constant 0 : i32
    %c0_i32_0 = arith.constant 0 : i32
    return %arg0, %arg1, %c0_i32 : i32, i32, i32
  }
  func.func @transform_3(%arg0: i32, %arg1: i32, %arg2: i32) -> (i32, i32, i32) {
    %c0_i32 = arith.constant 0 : i32
    %c0_i32_0 = arith.constant 0 : i32
    return %arg0, %arg1, %c0_i32 : i32, i32, i32
  }
}

</mosaic_0001>

<llo_original>
// kernel: tpu_custom_call.1
$region0: #{tpu_custom_call.1}
  #allocation0 [shape = 'u32[]', space=smem, size = 0x4, offset = 0x4, fixed_abs, tag = 'smem constant byte address 0x4 - core index']
  #allocation1 [shape = 'u32[144,128]{1,0:T(1,128)}', space=vmem, size = 0x12000, scoped, tag = 'internal scratch']
  #allocation2 [shape = 'f32[8,256]{1,0:T(8,128)}', space=vmem, size = 0x2000, scoped, tag = 'scratch operand']
  #allocation3 [shape = 'f32[8,256]{1,0:T(8,128)}', space=vmem, size = 0x2000, scoped, tag = 'scratch operand']
  %s0 = inlined_call_operand.hbm [shape: f32[8,256], index: 0, kind: input, shape index: {}]
  %s1 = inlined_call_operand.hbm [shape: f32[8,256], index: 1, kind: input, shape index: {}]
  %s2 = inlined_call_operand.vmem [shape: f32[1,8,1], index: 2, kind: output, shape index: {0}]
  %s3 = inlined_call_operand.vmem [shape: f32[1,8,1], index: 3, kind: output, shape index: {1}]
  %4 = xla_tuple %s2, %s3
  %s5 = sld [smem:[#allocation0]]
  $region42: #{tpu_custom_call.1} parent=0
    _
  %s7 = ssub.s32 1, %s5
  %s8 = scalar_select 0, %s7, %s5
  $region1: #{tpu_custom_call.1} parent=0
    #allocation4 [shape = 'u8[8192]{0}', space=vmem, size = 0x2000, scoped, tag = 'input window, operand 0, single buffered']
    #allocation5 [shape = 's32[1]{0}', space=sflag, size = 0x4, scoped, tag = 'scoped memory for tpu_custom_call.1']
    #allocation6 [shape = 'u8[8192]{0}', space=vmem, size = 0x2000, scoped, tag = 'input window, operand 1, single buffered']
    #allocation7 [shape = 's32[1]{0}', space=sflag, size = 0x4, scoped, tag = 'scoped memory for tpu_custom_call.1']
    %9 = vsyncpa [#allocation5], 0
    %10 = vsyncpa [#allocation7], 0
    // Predicated region
    $region2: #{tpu_custom_call.1} parent=1 // pred_check
      _
    $region3: #{tpu_custom_call.1} parent=1 // pred_check_branch
      %12 = sbr.rel (0) target = $region5
    $region4: #{tpu_custom_call.1} parent=1 // pred_region
      %s13 = sadd.s32 0, 0
      %s14 = smul.u32 2, %s13
      %s16 = ssub.s32 256, 256
      %17 = vsyncadd [#allocation5], %s16
      %s18 = smul.addr %s14, 128
      %s19 = scalar_lea.hbm %s0, %s18
      %s21 = sshll.u32 [#allocation4], 4
      %s22 = int_to_ptr.vmem [resolvable:$true] %s21
      %24 = dma.hbm_to_vmem [thread:$0]  %s19, 256, %s22, [#allocation5]
    $region5: #{tpu_custom_call.1} parent=1 // pred_fallthru
      _
    // Predicated region
    $region6: #{tpu_custom_call.1} parent=1 // pred_check
      _
    $region7: #{tpu_custom_call.1} parent=1 // pred_check_branch
      %26 = sbr.rel (0) target = $region9
    $region8: #{tpu_custom_call.1} parent=1 // pred_region
      %s27 = sadd.s32 0, 0
      %s28 = smul.u32 2, %s27
      %s30 = ssub.s32 256, 256
      %31 = vsyncadd [#allocation7], %s30
      %s32 = smul.addr %s28, 128
      %s33 = scalar_lea.hbm %s1, %s32
      %s35 = sshll.u32 [#allocation6], 4
      %s36 = int_to_ptr.vmem [resolvable:$true] %s35
      %38 = dma.hbm_to_vmem [thread:$0]  %s33, 256, %s36, [#allocation7]
    $region9: #{tpu_custom_call.1} parent=1 // pred_fallthru
      _
    // Predicated region
    $region10: #{tpu_custom_call.1} parent=1 // pred_check
      _
    $region11: #{tpu_custom_call.1} parent=1 // pred_check_branch
      %40 = sbr.rel (0) target = $region13
    $region12: #{tpu_custom_call.1} parent=1 // pred_region
      %41 = dma.done [#allocation5], 256
    $region13: #{tpu_custom_call.1} parent=1 // pred_fallthru
      _
    // Predicated region
    $region14: #{tpu_custom_call.1} parent=1 // pred_check
      _
    $region15: #{tpu_custom_call.1} parent=1 // pred_check_branch
      %43 = sbr.rel (0) target = $region17
    $region16: #{tpu_custom_call.1} parent=1 // pred_region
      %44 = dma.done [#allocation7], 256
    $region17: #{tpu_custom_call.1} parent=1 // pred_fallthru
      _
    %s45 = sadd.s32 0, 0
    %s46 = smul.u32 2, %s45
    %s47 = sadd.s32 0, 0
    %s48 = smul.u32 2, %s47
    %p49 = scmp.eq.s32.totalorder 0, 0
    // Predicated region
    $region18: #{tpu_custom_call.1} parent=1 // pred_check
      %p50 = pneg %p49
    $region19: #{tpu_custom_call.1} parent=1 // pred_check_branch
      %52 = sbr.rel (%p50) target = $region21
    $region20: #{tpu_custom_call.1} parent=1 // pred_region
      %53 = vst [vmem:[#allocation2] sm:$0xff] 0.0
      %54 = vst [vmem:[#allocation2 + $0x8] sm:$0xff] 0.0
      %55 = vst [vmem:[#allocation3] sm:$0xff] 0.0
      %56 = vst [vmem:[#allocation3 + $0x8] sm:$0xff] 0.0
    $region21: #{tpu_custom_call.1} parent=1 // pred_fallthru
      _
    %v57 = vld [vmem:[#allocation4] sm:$0xff]
    %v58 = vld [vmem:[#allocation4 + $0x8] sm:$0xff]
    %v59 = vld [vmem:[#allocation6] sm:$0xff]
    %v60 = vld [vmem:[#allocation6 + $0x8] sm:$0xff]
    %v61 = vmul.f32 %v59, %v57
    %v62 = vmul.f32 %v60, %v58
    %v63 = vadd.f32 %v61, 0.0
    %v64 = vadd.f32 %v62, 0.0
    %v65 = vadd.f32 %v59, 0.0
    %v66 = vadd.f32 %v60, 0.0
    %v67 = vadd.f32 %v65, %v57
    %v68 = vadd.f32 %v66, %v58
    %v69 = vld [vmem:[#allocation2] sm:$0xff]
    %v70 = vld [vmem:[#allocation2 + $0x8] sm:$0xff]
    %v71 = vadd.f32 %v69, %v63
    %v72 = vadd.f32 %v70, %v64
    %73 = vst [vmem:[#allocation2] sm:$0xff] %v71
    %74 = vst [vmem:[#allocation2 + $0x8] sm:$0xff] %v72
    %v75 = vld [vmem:[#allocation3] sm:$0xff]
    %v76 = vld [vmem:[#allocation3 + $0x8] sm:$0xff]
    %v77 = vadd.f32 %v75, %v67
    %v78 = vadd.f32 %v76, %v68
    %79 = vst [vmem:[#allocation3] sm:$0xff] %v77
    %80 = vst [vmem:[#allocation3 + $0x8] sm:$0xff] %v78
    // Predicated region
    $region22: #{tpu_custom_call.1} parent=1 // pred_check
      %p81 = pneg %p49
    $region23: #{tpu_custom_call.1} parent=1 // pred_check_branch
      %83 = sbr.rel (%p81) target = $region25
    $region24: #{tpu_custom_call.1} parent=1 // pred_region
      %v84 = vld [vmem:[#allocation2] sm:$0xff]
      %v85 = vld [vmem:[#allocation2 + $0x8] sm:$0xff]
      %v86 = vadd.f32 %v84, %v85
      %87 = vadd.xlane.f32.xlu0 %v86
      %v88 = vpop.xlane.xlu0 %87
      %vm89 = vcmask 7168
      %90 = vst.msk [vmem:[%s2] sm:$0xff] %vm89, %v88
      %v91 = vld [vmem:[#allocation3] sm:$0xff]
      %v92 = vld [vmem:[#allocation3 + $0x8] sm:$0xff]
      %v93 = vadd.f32 %v91, %v92
      %94 = vadd.xlane.f32.xlu0 %v93
      %v95 = vpop.xlane.xlu0 %94
      %96 = vst.msk [vmem:[%s3] sm:$0xff] %vm89, %v95
    $region25: #{tpu_custom_call.1} parent=1 // pred_fallthru
      _
    // Predicated region
    $region26: #{tpu_custom_call.1} parent=1 // pred_check
      _
    $region27: #{tpu_custom_call.1} parent=1 // pred_check_branch
      %98 = sbr.rel (0) target = $region29
    $region28: #{tpu_custom_call.1} parent=1 // pred_region
      _
    $region29: #{tpu_custom_call.1} parent=1 // pred_fallthru
      _
    // Predicated region
    $region30: #{tpu_custom_call.1} parent=1 // pred_check
      _
    $region31: #{tpu_custom_call.1} parent=1 // pred_check_branch
      %100 = sbr.rel (0) target = $region33
    $region32: #{tpu_custom_call.1} parent=1 // pred_region
      _
    $region33: #{tpu_custom_call.1} parent=1 // pred_fallthru
      _
    // Predicated region
    $region34: #{tpu_custom_call.1} parent=1 // pred_check
      _
    $region35: #{tpu_custom_call.1} parent=1 // pred_check_branch
      %102 = sbr.rel (0) target = $region37
    $region36: #{tpu_custom_call.1} parent=1 // pred_region
      _
    $region37: #{tpu_custom_call.1} parent=1 // pred_fallthru
      _
    // Predicated region
    $region38: #{tpu_custom_call.1} parent=1 // pred_check
      _
    $region39: #{tpu_custom_call.1} parent=1 // pred_check_branch
      %104 = sbr.rel (0) target = $region41
    $region40: #{tpu_custom_call.1} parent=1 // pred_region
      _
    $region41: #{tpu_custom_call.1} parent=1 // pred_fallthru
      _
    %105 = vsyncpa [#allocation5], 1
    %106 = vsyncpa [#allocation7], 1

</llo_original>
